<compile_context>
chip_gen: v6e
topology: v6e:2x2x1
jax: 0.10.0
libtpu: 0.0.40
codegen_flags: <defaults>
</compile_context>

<pallas_src>
import functools

import jax
import jax.numpy as jnp
from jax import lax
from jax.experimental import pallas as pl
from jax.experimental.pallas import tpu as pltpu


# ----------------------- fused linear + cross-entropy ---------------------- #
def _fused_linear_ce_kernel(x_ref, w_ref, tgt_ref, out_ref, loss_ref, *, out_dim):
    # Bias-free linear: contract x (B, K) against un-transposed weight (N, K).
    # bf16 MXU operands, f32 accumulation.
    x = x_ref[...].astype(jnp.bfloat16)
    w = w_ref[...].astype(jnp.bfloat16)
    logits = lax.dot_general(
        x, w,
        dimension_numbers=(((1,), (1,)), ((), ())),
        preferred_element_type=jnp.float32,
    )  # (B, N) f32
    out_ref[...] = logits.astype(out_ref.dtype)

    # Cross-entropy epilogue (f32 VPU/EUP math).
    # logits[:, c*S:(c+1)*S] are the class-c logits for the S spatial
    # positions; out_dim is tiny & static, so unroll the class axis.
    B, N = logits.shape
    S = N // out_dim
    tgt = tgt_ref[...]  # (B, S) int32

    cls = [logits[:, c * S:(c + 1) * S] for c in range(out_dim)]  # each (B, S)
    m = cls[0]
    for c in range(1, out_dim):
        m = jnp.maximum(m, cls[c])

    denom = jnp.zeros_like(m)
    tgt_logit = jnp.zeros_like(m)
    for c in range(out_dim):
        denom = denom + jnp.exp(cls[c] - m)
        tgt_logit = tgt_logit + jnp.where(tgt == c, cls[c], 0.0)

    lse = m + jnp.log(denom)                                   # (B, S)
    loss_ref[0, 0] = jnp.sum(lse - tgt_logit) * (1.0 / (B * S))


# --------------------------- plain linear (no loss) ------------------------ #
def _linear_kernel(x_ref, w_ref, out_ref):
    out_ref[...] = lax.dot_general(
        x_ref[...].astype(jnp.bfloat16),
        w_ref[...].astype(jnp.bfloat16),
        dimension_numbers=(((1,), (1,)), ((), ())),
        preferred_element_type=jnp.float32,
    ).astype(out_ref.dtype)


_VMEM = pl.BlockSpec(memory_space=pltpu.MemorySpace.VMEM)
_SMEM = pl.BlockSpec(memory_space=pltpu.MemorySpace.SMEM)


# ------------------------------- LinProbe ---------------------------------- #
def lin_probe_forward(x, weight, out_dim, targets=None):
    """Mirror of LinProbe.forward.

    x:       (B, C, 8, 8)            flattened row-major to (B, C*64)
    weight:  (out_dim*64, C*64)      nn.Linear weight (bias=False); any float
                                     dtype (bf16 storage recommended)
    targets: optional int array reshapeable to (B, 64)
    """
    B = x.shape[0]
    x2 = x.reshape(B, -1)                 # row-major flatten == torch .view
    K = x2.shape[1]
    N = weight.shape[0]
    assert weight.shape[1] == K and N == out_dim * 64

    if targets is not None:
        assert targets.shape[0] == B
        tgt2 = targets.reshape(B, 64).astype(jnp.int32)
        out, loss = pl.pallas_call(
            functools.partial(_fused_linear_ce_kernel, out_dim=out_dim),
            out_shape=(
                jax.ShapeDtypeStruct((B, N), jnp.float32),
                jax.ShapeDtypeStruct((1, 1), jnp.float32),
            ),
            in_specs=[_VMEM, _VMEM, _VMEM],
            out_specs=(_VMEM, _SMEM),
        )(x2, weight, tgt2)
        return out.reshape(B, out_dim, 64), loss[0, 0]

    out = pl.pallas_call(
        _linear_kernel,
        out_shape=jax.ShapeDtypeStruct((B, N), jnp.float32),
        in_specs=[_VMEM, _VMEM],
        out_specs=_VMEM,
    )(x2, weight)
    return out, None


# --------------------------------- main ------------------------------------ #
if __name__ == "__main__":
    in_channels = 4
    out_dim = 3
    B = 2

    key = jax.random.PRNGKey(0)
    k_x, k_w, k_t = jax.random.split(key, 3)

    # deterministic "nn.Linear(bias=False)" init: U(-1/sqrt(fan_in), 1/sqrt(fan_in))
    fan_in = in_channels * 64
    bound = 1.0 / (fan_in ** 0.5)
    weight_f32 = jax.random.uniform(
        k_w, (out_dim * 64, fan_in), jnp.float32, minval=-bound, maxval=bound
    )
    # Store the weight stream in bf16: the workload is weight-bandwidth bound,
    # so this halves the dominant HBM read; accumulation stays f32 in-kernel.
    weight = weight_f32.astype(jnp.bfloat16)

    x = jax.random.normal(k_x, (B, in_channels, 8, 8), jnp.float32)
    targets = jax.random.randint(k_t, (B, 8, 8), 0, out_dim, jnp.int32)

    out3, loss = lin_probe_forward(x, weight, out_dim, targets)
    out3 = jax.block_until_ready(out3)
    loss = jax.block_until_ready(loss)

    # ---- reference at identical operand precision (tight check) ----
    x2 = x.reshape(B, -1)
    ref_out = lax.dot_general(
        x2.astype(jnp.bfloat16), weight,
        dimension_numbers=(((1,), (1,)), ((), ())),
        preferred_element_type=jnp.float32,
    ).reshape(B, out_dim, 64)
    tgt2 = targets.reshape(B, 64)
    lse = jax.scipy.special.logsumexp(ref_out, axis=1)                  # (B, 64)
    tgt_logit = jnp.take_along_axis(ref_out, tgt2[:, None, :], axis=1)[:, 0, :]
    ref_loss = jnp.mean(lse - tgt_logit)

    assert out3.shape == (B, out_dim, 64)
    assert jnp.allclose(out3, ref_out, atol=1e-3, rtol=1e-3), "logits mismatch"
    assert jnp.allclose(loss, ref_loss, atol=1e-3, rtol=1e-3), "loss mismatch"

    # ---- loose check against full-f32 module semantics (only the bf16
    #      weight/activation rounding separates the two) ----
    f32_out = (x2 @ weight_f32.T).reshape(B, out_dim, 64)
    assert jnp.allclose(out3, f32_out, atol=5e-2, rtol=5e-2), "f32 drift too large"

    # ---- targets=None path ----
    out_flat, no_loss = lin_probe_forward(x, weight, out_dim, None)
    out_flat = jax.block_until_ready(out_flat)
    assert out_flat.shape == (B, out_dim * 64) and no_loss is None

    print("KERNEL_OK")
</pallas_src>

<mosaic_0001>
module attributes {stable_mosaic.version = 11 : i64} {
  func.func @_fused_linear_ce_kernel(%arg0: memref<2x256xf32, #tpu.memory_space<vmem>>, %arg1: memref<192x256xbf16, #tpu.memory_space<vmem>>, %arg2: memref<2x64xi32, #tpu.memory_space<vmem>>, %arg3: memref<2x192xf32, #tpu.memory_space<vmem>>, %arg4: memref<1x1xf32, #tpu.memory_space<smem>>) attributes {dimension_semantics = [], scalar_prefetch = 0 : i64, scratch_operands = 0 : i64, tpu.core_type = #tpu.core_type<tc>} {
    %c0 = arith.constant 0 : index
    %c0_0 = arith.constant 0 : index
    %0 = vector.load %arg0[%c0, %c0_0] : memref<2x256xf32, #tpu.memory_space<vmem>>, vector<2x256xf32>
    %1 = arith.truncf %0 : vector<2x256xf32> to vector<2x256xbf16>
    %c0_1 = arith.constant 0 : index
    %c0_2 = arith.constant 0 : index
    %2 = vector.load %arg1[%c0_1, %c0_2] : memref<192x256xbf16, #tpu.memory_space<vmem>>, vector<192x256xbf16>
    %cst = arith.constant dense<0.000000e+00> : vector<2x192xf32>
    %3 = tpu.matmul %1, %2, %cst {dimension_numbers = #tpu.dot_dimension_numbers<[1], [1], [0], [0], [0, 0, 1, 0], [], []>} : vector<2x256xbf16>, vector<192x256xbf16>, vector<2x192xf32> -> vector<2x192xf32>
    %c0_3 = arith.constant 0 : index
    %c0_4 = arith.constant 0 : index
    %4 = vector.load %arg3[%c0_3, %c0_4] : memref<2x192xf32, #tpu.memory_space<vmem>>, vector<2x192xf32>
    tpu.vector_store %arg3[%c0_3, %c0_4], %3 {strides = array<i32>} : memref<2x192xf32, #tpu.memory_space<vmem>>, vector<2x192xf32>,
    %c0_5 = arith.constant 0 : index
    %c0_6 = arith.constant 0 : index
    %5 = vector.load %arg2[%c0_5, %c0_6] : memref<2x64xi32, #tpu.memory_space<vmem>>, vector<2x64xi32>
    %6 = vector.extract_strided_slice %3 {offsets = [0, 0], sizes = [2, 64], strides = [1, 1]} : vector<2x192xf32> to vector<2x64xf32>
    %7 = vector.extract_strided_slice %3 {offsets = [0, 64], sizes = [2, 64], strides = [1, 1]} : vector<2x192xf32> to vector<2x64xf32>
    %8 = vector.extract_strided_slice %3 {offsets = [0, 128], sizes = [2, 64], strides = [1, 1]} : vector<2x192xf32> to vector<2x64xf32>
    %9 = arith.maximumf %6, %7 : vector<2x64xf32>
    %10 = arith.maximumf %9, %8 : vector<2x64xf32>
    %cst_7 = arith.constant 0.000000e+00 : f32
    %11 = vector.broadcast %cst_7 : f32 to vector<2x64xf32>
    %cst_8 = arith.constant 0.000000e+00 : f32
    %12 = vector.broadcast %cst_8 : f32 to vector<2x64xf32>
    %13 = arith.subf %6, %10 : vector<2x64xf32>
    %14 = math.exp %13 : vector<2x64xf32>
    %15 = arith.addf %11, %14 : vector<2x64xf32>
    %c0_i32 = arith.constant 0 : i32
    %16 = vector.broadcast %c0_i32 : i32 to vector<2x64xi32>
    %17 = arith.cmpi eq, %5, %16 : vector<2x64xi32>
    %cst_9 = arith.constant 0.000000e+00 : f32
    %18 = vector.broadcast %cst_9 : f32 to vector<2x64xf32>
    %19 = arith.select %17, %6, %18 : vector<2x64xi1>, vector<2x64xf32>
    %20 = arith.addf %12, %19 : vector<2x64xf32>
    %21 = arith.subf %7, %10 : vector<2x64xf32>
    %22 = math.exp %21 : vector<2x64xf32>
    %23 = arith.addf %15, %22 : vector<2x64xf32>
    %c1_i32 = arith.constant 1 : i32
    %24 = vector.broadcast %c1_i32 : i32 to vector<2x64xi32>
    %25 = arith.cmpi eq, %5, %24 : vector<2x64xi32>
    %cst_10 = arith.constant 0.000000e+00 : f32
    %26 = vector.broadcast %cst_10 : f32 to vector<2x64xf32>
    %27 = arith.select %25, %7, %26 : vector<2x64xi1>, vector<2x64xf32>
    %28 = arith.addf %20, %27 : vector<2x64xf32>
    %29 = arith.subf %8, %10 : vector<2x64xf32>
    %30 = math.exp %29 : vector<2x64xf32>
    %31 = arith.addf %23, %30 : vector<2x64xf32>
    %c2_i32 = arith.constant 2 : i32
    %32 = vector.broadcast %c2_i32 : i32 to vector<2x64xi32>
    %33 = arith.cmpi eq, %5, %32 : vector<2x64xi32>
    %cst_11 = arith.constant 0.000000e+00 : f32
    %34 = vector.broadcast %cst_11 : f32 to vector<2x64xf32>
    %35 = arith.select %33, %8, %34 : vector<2x64xi1>, vector<2x64xf32>
    %36 = arith.addf %28, %35 : vector<2x64xf32>
    %37 = math.log %31 : vector<2x64xf32>
    %38 = arith.addf %10, %37 : vector<2x64xf32>
    %39 = arith.subf %38, %36 : vector<2x64xf32>
    %40 = vector.shape_cast %39 : vector<2x64xf32> to vector<1x2x64xf32>
    %cst_12 = arith.constant dense<0.000000e+00> : vector<1xf32>
    %41 = vector.multi_reduction <add>, %40, %cst_12 [1, 2] : vector<1x2x64xf32> to vector<1xf32>
    %42 = vector.shape_cast %41 : vector<1xf32> to vector<1x1x1xf32>
    %43 = vector.extract %42[0, 0, 0] : f32 from vector<1x1x1xf32>
    %cst_13 = arith.constant 7.812500e-03 : f32
    %44 = arith.mulf %43, %cst_13 : f32
    %c0_14 = arith.constant 0 : index
    %c0_15 = arith.constant 0 : index
    %45 = memref.load %arg4[%c0_14, %c0_15] : memref<1x1xf32, #tpu.memory_space<smem>>
    memref.store %44, %arg4[%c0_14, %c0_15] : memref<1x1xf32, #tpu.memory_space<smem>>
    return
  }
}

</mosaic_0001>

<llo_original>
// kernel: tpu_custom_call.1
$region0: #{tpu_custom_call.1}
  #allocation0 [shape = 'u32[]', space=smem, size = 0x4, offset = 0x4, fixed_abs, tag = 'smem constant byte address 0x4 - core index']
  #allocation1 [shape = 'u32[144,128]{1,0:T(1,128)}', space=vmem, size = 0x12000, scoped, tag = 'internal scratch']
  %s0 = inlined_call_operand.hbm [shape: f32[2,256], index: 0, kind: input, shape index: {}]
  %s1 = inlined_call_operand.hbm [shape: bf16[192,256], index: 1, kind: input, shape index: {}]
  %s2 = inlined_call_operand.vmem [shape: s32[2,64], index: 2, kind: input, shape index: {}]
  %s3 = inlined_call_operand.hbm [shape: f32[2,192], index: 3, kind: output, shape index: {0}]
  %s4 = inlined_call_operand.hbm [shape: f32[1,1], index: 4, kind: output, shape index: {1}]
  %5 = xla_tuple %s3, %s4
  %s6 = sld [smem:[#allocation0]]
  $region38: #{tpu_custom_call.1} parent=0
    _
  %s8 = ssub.s32 1, %s6
  %s9 = scalar_select 0, %s8, %s6
  $region1: #{tpu_custom_call.1} parent=0
    #allocation2 [shape = 'u8[2048]{0}', space=vmem, size = 0x800, scoped, tag = 'input window, operand 0, single buffered']
    #allocation3 [shape = 's32[1]{0}', space=sflag, size = 0x4, scoped, tag = 'scoped memory for tpu_custom_call.1']
    #allocation4 [shape = 's32[1]{0}', space=sflag, size = 0x4, scoped, tag = 'scoped memory for tpu_custom_call.1']
    #allocation5 [shape = 's32[1]{0}', space=sflag, size = 0x4, scoped, tag = 'scoped memory for tpu_custom_call.1']
    #allocation6 [shape = 'u8[98304]{0}', space=vmem, size = 0x18000, scoped, tag = 'input window, operand 1, single buffered']
    #allocation7 [shape = 's32[1]{0}', space=sflag, size = 0x4, scoped, tag = 'scoped memory for tpu_custom_call.1']
    #allocation8 [shape = 'u8[2048]{0}', space=vmem, size = 0x800, scoped, tag = 'output window, operand 0, single buffered']
    #allocation9 [shape = 'u8[512]{0}', space=smem, size = 0x200, scoped, tag = 'output window, operand 1, single buffered']
    %10 = vsyncpa [#allocation3], 0
    %11 = vsyncpa [#allocation7], 0
    %12 = vsyncpa [#allocation4], 0
    %13 = vsyncpa [#allocation5], 0
    // Predicated region
    $region2: #{tpu_custom_call.1} parent=1 // pred_check
      _
    $region3: #{tpu_custom_call.1} parent=1 // pred_check_branch
      %15 = sbr.rel (0) target = $region5
    $region4: #{tpu_custom_call.1} parent=1 // pred_region
      %s17 = ssub.s32 64, 64
      %18 = vsyncadd [#allocation3], %s17
      %s20 = sshll.u32 [#allocation2], 4
      %s21 = int_to_ptr.vmem [resolvable:$true] %s20
      %23 = dma.hbm_to_vmem [thread:$0]  %s0, 64, %s21, [#allocation3]
    $region5: #{tpu_custom_call.1} parent=1 // pred_fallthru
      _
    // Predicated region
    $region6: #{tpu_custom_call.1} parent=1 // pred_check
      _
    $region7: #{tpu_custom_call.1} parent=1 // pred_check_branch
      %25 = sbr.rel (0) target = $region9
    $region8: #{tpu_custom_call.1} parent=1 // pred_region
      %s27 = ssub.s32 3072, 3072
      %28 = vsyncadd [#allocation7], %s27
      %s29 = sshll.u32 [#allocation6], 4
      %s30 = int_to_ptr.vmem [resolvable:$true] %s29
      %35 = dma.hbm_to_vmem [thread:$0]  %s1, 3072, %s30, [#allocation7], 128, 128, 8
    $region9: #{tpu_custom_call.1} parent=1 // pred_fallthru
      _
    // Predicated region
    $region10: #{tpu_custom_call.1} parent=1 // pred_check
      _
    $region11: #{tpu_custom_call.1} parent=1 // pred_check_branch
      %37 = sbr.rel (0) target = $region13
    $region12: #{tpu_custom_call.1} parent=1 // pred_region
      _
    $region13: #{tpu_custom_call.1} parent=1 // pred_fallthru
      _
    // Predicated region
    $region14: #{tpu_custom_call.1} parent=1 // pred_check
      _
    $region15: #{tpu_custom_call.1} parent=1 // pred_check_branch
      %39 = sbr.rel (0) target = $region17
    $region16: #{tpu_custom_call.1} parent=1 // pred_region
      %40 = dma.done [#allocation3], 64
    $region17: #{tpu_custom_call.1} parent=1 // pred_fallthru
      _
    // Predicated region
    $region18: #{tpu_custom_call.1} parent=1 // pred_check
      _
    $region19: #{tpu_custom_call.1} parent=1 // pred_check_branch
      %42 = sbr.rel (0) target = $region21
    $region20: #{tpu_custom_call.1} parent=1 // pred_region
      %43 = dma.done [#allocation7], 3072
    $region21: #{tpu_custom_call.1} parent=1 // pred_fallthru
      _
    %v45 = vld [vmem:[#allocation2] sm:$0xf]
    %v48 = vunpack.c.l.s4 1983009808
    %v49 = vunpack.c.0.s8 %v48
    %v50 = vlaneseq
    %v51 = vshrl.u32 %v50, 7
    %v52 = vsub.s32 %v49, %v51
    %v53 = vrot.slane %v45, %v52
    %v54 = vcombine.high %v53, %v53
    %v57 = vpack.c.bf16 %v53, %v53
    %v58 = vpack.c.bf16 %v54, %v54
    %v59 = vld [vmem:[#allocation6] sm:$0xff]
    %v60 = vld [vmem:[#allocation6 + $0x8] sm:$0xff]
    %v61 = vld [vmem:[#allocation6 + $0x10] sm:$0xff]
    %v62 = vld [vmem:[#allocation6 + $0x18] sm:$0xff]
    %v63 = vld [vmem:[#allocation6 + $0x20] sm:$0xff]
    %v64 = vld [vmem:[#allocation6 + $0x28] sm:$0xff]
    %v65 = vld [vmem:[#allocation6 + $0x30] sm:$0xff]
    %v66 = vld [vmem:[#allocation6 + $0x38] sm:$0xff]
    %v67 = vld [vmem:[#allocation6 + $0x40] sm:$0xff]
    %v68 = vld [vmem:[#allocation6 + $0x48] sm:$0xff]
    %v69 = vld [vmem:[#allocation6 + $0x50] sm:$0xff]
    %v70 = vld [vmem:[#allocation6 + $0x58] sm:$0xff]
    %v71 = vld [vmem:[#allocation6 + $0x60] sm:$0xff]
    %v72 = vld [vmem:[#allocation6 + $0x68] sm:$0xff]
    %v73 = vld [vmem:[#allocation6 + $0x70] sm:$0xff]
    %v74 = vld [vmem:[#allocation6 + $0x78] sm:$0xff]
    %v75 = vld [vmem:[#allocation6 + $0x80] sm:$0xff]
    %v76 = vld [vmem:[#allocation6 + $0x88] sm:$0xff]
    %v77 = vld [vmem:[#allocation6 + $0x90] sm:$0xff]
    %v78 = vld [vmem:[#allocation6 + $0x98] sm:$0xff]
    %v79 = vld [vmem:[#allocation6 + $0xa0] sm:$0xff]
    %v80 = vld [vmem:[#allocation6 + $0xa8] sm:$0xff]
    %v81 = vld [vmem:[#allocation6 + $0xb0] sm:$0xff]
    %v82 = vld [vmem:[#allocation6 + $0xb8] sm:$0xff]
    %v107 = vunpack.c.l.b16 %v59
    %v108 = vunpack.c.h.b16 %v59
    %v109 = vunpack.c.l.b16 %v60
    %v110 = vunpack.c.h.b16 %v60
    %v111 = vunpack.c.l.b16 %v61
    %v112 = vunpack.c.h.b16 %v61
    %v113 = vunpack.c.l.b16 %v62
    %v114 = vunpack.c.h.b16 %v62
    %v115 = vunpack.c.l.b16 %v63
    %v116 = vunpack.c.h.b16 %v63
    %v117 = vunpack.c.l.b16 %v64
    %v118 = vunpack.c.h.b16 %v64
    %v119 = vunpack.c.l.b16 %v65
    %v120 = vunpack.c.h.b16 %v65
    %v121 = vunpack.c.l.b16 %v66
    %v122 = vunpack.c.h.b16 %v66
    %v123 = vunpack.c.l.b16 %v67
    %v124 = vunpack.c.h.b16 %v67
    %v125 = vunpack.c.l.b16 %v68
    %v126 = vunpack.c.h.b16 %v68
    %v127 = vunpack.c.l.b16 %v69
    %v128 = vunpack.c.h.b16 %v69
    %v129 = vunpack.c.l.b16 %v70
    %v130 = vunpack.c.h.b16 %v70
    %v131 = vunpack.c.l.b16 %v71
    %v132 = vunpack.c.h.b16 %v71
    %v133 = vunpack.c.l.b16 %v72
    %v134 = vunpack.c.h.b16 %v72
    %v135 = vunpack.c.l.b16 %v73
    %v136 = vunpack.c.h.b16 %v73
    %v137 = vunpack.c.l.b16 %v74
    %v138 = vunpack.c.h.b16 %v74
    %v139 = vunpack.c.l.b16 %v75
    %v140 = vunpack.c.h.b16 %v75
    %v141 = vunpack.c.l.b16 %v76
    %v142 = vunpack.c.h.b16 %v76
    %v143 = vunpack.c.l.b16 %v77
    %v144 = vunpack.c.h.b16 %v77
    %v145 = vunpack.c.l.b16 %v78
    %v146 = vunpack.c.h.b16 %v78
    %v147 = vunpack.c.l.b16 %v79
    %v148 = vunpack.c.h.b16 %v79
    %v149 = vunpack.c.l.b16 %v80
    %v150 = vunpack.c.h.b16 %v80
    %v151 = vunpack.c.l.b16 %v81
    %v152 = vunpack.c.h.b16 %v81
    %v153 = vunpack.c.l.b16 %v82
    %v154 = vunpack.c.h.b16 %v82
    %v155 = vpack.c.b16 %v109, %v107
    %v156 = vpack.c.b16 %v110, %v108
    %v157 = vpack.c.b16 %v113, %v111
    %v158 = vpack.c.b16 %v114, %v112
    %v159 = vpack.c.b16 %v117, %v115
    %v160 = vpack.c.b16 %v118, %v116
    %v161 = vpack.c.b16 %v121, %v119
    %v162 = vpack.c.b16 %v122, %v120
    %v163 = vpack.c.b16 %v125, %v123
    %v164 = vpack.c.b16 %v126, %v124
    %v165 = vpack.c.b16 %v129, %v127
    %v166 = vpack.c.b16 %v130, %v128
    %v167 = vpack.c.b16 %v133, %v131
    %v168 = vpack.c.b16 %v134, %v132
    %v169 = vpack.c.b16 %v137, %v135
    %v170 = vpack.c.b16 %v138, %v136
    %v171 = vpack.c.b16 %v141, %v139
    %v172 = vpack.c.b16 %v142, %v140
    %v173 = vpack.c.b16 %v145, %v143
    %v174 = vpack.c.b16 %v146, %v144
    %v175 = vpack.c.b16 %v149, %v147
    %v176 = vpack.c.b16 %v150, %v148
    %v177 = vpack.c.b16 %v153, %v151
    %v178 = vpack.c.b16 %v154, %v152
    %203 = vmatprep.subr.bf16.mxu0 %v170
    %204 = vmatpush1.bf16.xpose.msra.mxu0 %v169
    %205 = vmatprep.subr.bf16.mxu0 %v168
    %206 = vmatpush1.bf16.xpose.msra.mxu0 %v167
    %207 = vmatprep.subr.bf16.mxu0 %v166
    %208 = vmatpush1.bf16.xpose.msra.mxu0 %v165
    %209 = vmatprep.subr.bf16.mxu0 %v164
    %210 = vmatpush1.bf16.xpose.msra.mxu0 %v163
    %211 = vmatprep.subr.bf16.mxu0 %v162
    %212 = vmatpush1.bf16.xpose.msra.mxu0 %v161
    %213 = vmatprep.subr.bf16.mxu0 %v160
    %214 = vmatpush1.bf16.xpose.msra.mxu0 %v159
    %215 = vmatprep.subr.bf16.mxu0 %v158
    %216 = vmatpush1.bf16.xpose.msra.mxu0 %v157
    %217 = vmatprep.subr.bf16.mxu0 %v156
    %218 = vmatpush1.bf16.xpose.msra.mxu0 %v155
    %219 = vmatprep.subr.bf16.mxu0 0
    %220 = vmatpush2.bf16.xpose.msra.mxu0 0
    %221 = vmatprep.subr.bf16.mxu0 0
    %222 = vmatpush2.bf16.xpose.msra.mxu0 0
    %223 = vmatprep.subr.bf16.mxu0 0
    %224 = vmatpush2.bf16.xpose.msra.mxu0 0
    %225 = vmatprep.subr.bf16.mxu0 0
    %226 = vmatpush2.bf16.xpose.msra.mxu0 0
    %227 = vmatprep.subr.bf16.mxu0 %v178
    %228 = vmatpush2.bf16.xpose.msra.mxu0 %v177
    %229 = vmatprep.subr.bf16.mxu0 %v176
    %230 = vmatpush2.bf16.xpose.msra.mxu0 %v175
    %231 = vmatprep.subr.bf16.mxu0 %v174
    %232 = vmatpush2.bf16.xpose.msra.mxu0 %v173
    %233 = vmatprep.subr.bf16.mxu0 %v172
    %234 = vmatpush2.bf16.xpose.msra.mxu0 %v171
    %235 = vmatprep.mubr.bf16.mxu0 %v58
    %236 = vmatmul.mubr.bf16.gmra.mxu0 %v57
    %v237 = vpop.f32.mrf.mxu0
    %v238 = vadd.f32 0.0, %v237
    %v239 = vpop.f32.mrf.mxu0
    %v240 = vadd.f32 0.0, %v239
    %v241 = vpop.f32.mrf.mxu0
    %v242 = vpop.f32.mrf.mxu0
    %243 = vdwg.mxu0
    %v246 = vcombine.low %v238, %v240
    %v248 = vunpack.c.l.s4 1983009808
    %v249 = vunpack.c.0.s8 %v248
    %v250 = vlaneseq
    %v251 = vshrl.u32 %v250, 7
    %v252 = vsub.s32 %v249, %v251
    %v253 = vrot.slane %v246, %v252
    %vm255 = vcmask 1041408
    %vm256 = vcmask 519170
    %vm257 = vmor %vm256, %vm255
    %258 = vst.msk [vmem:[#allocation8] sm:$0xf] %vm257, %v253
    %v259 = vld [vmem:[%s2] sm:$0x3]
    %260 = vrot.lane.b32.xlu0 %v238, 64
    %v261 = vpop.permute.xlu0 %260
    %v263 = vmax.f32 %v238, %v261
    %v264 = vmax.f32 %v263, %v240
    %v265 = vsub.f32 %v238, %v264
    %v266 = vmul.f32 %v265, 1.442695
    %v267 = vpow.pop %v266
    %v268 = vadd.f32 %v267, 0.0
    %vm269 = vcmp.eq.s32.totalorder %v259, 0
    %v270 = vsel %vm269, %v238, 0.0
    %v271 = vadd.f32 %v270, 0.0
    %273 = vrot.lane.b32.xlu0 %v264, 64
    %v274 = vpop.permute.xlu0 %273
    %v276 = vsub.f32 %v238, %v274
    %v277 = vmul.f32 %v276, 1.442695
    %v278 = vpow.pop %v277
    %280 = vrot.lane.b32.xlu0 %v278, 64
    %v281 = vpop.permute.xlu0 %280
    %v283 = vadd.f32 %v268, %v281
    %vm284 = vcmp.eq.s32.totalorder %v259, 1
    %v285 = vsel %vm284, %v261, 0.0
    %v286 = vadd.f32 %v271, %v285
    %v287 = vsub.f32 %v240, %v264
    %v288 = vmul.f32 %v287, 1.442695
    %v289 = vpow.pop %v288
    %v290 = vadd.f32 %v283, %v289
    %vm291 = vcmp.eq.s32.totalorder %v259, 2
    %v292 = vsel %vm291, %v240, 0.0
    %v293 = vadd.f32 %v286, %v292
    %v294 = vlog2.pop %v290
    %v295 = vmul.f32 %v294, 0.6931472
    %v296 = vadd.f32 %v264, %v295
    %v297 = vsub.f32 %v296, %v293
    %vm298 = vcmask 517120
    %v299 = vsel %vm298, %v297, 0.0
    %300 = vadd.xlane.f32.xlu0 %v299
    %v301 = vpop.xlane.xlu0 %300
    %v302 = vrot.slane %v301, 4
    %v303 = vadd.f32 %v301, %v302
    %v304 = vrot.slane %v303, 2
    %v305 = vadd.f32 %v303, %v304
    %v306 = vrot.slane %v305, 1
    %v307 = vadd.f32 %v305, %v306
    %s308 = vtos %v307
    %s309 = smul.f32 %s308, 0.0078125
    %s310 = scalar_lea.smem [#allocation9], 0
    %311 = sst [smem:[%s310]] %s309
    // Predicated region
    $region22: #{tpu_custom_call.1} parent=1 // pred_check
      _
    $region23: #{tpu_custom_call.1} parent=1 // pred_check_branch
      %313 = sbr.rel (0) target = $region25
    $region24: #{tpu_custom_call.1} parent=1 // pred_region
      %s315 = ssub.s32 64, 64
      %316 = vsyncadd [#allocation4], %s315
      %s318 = sshll.u32 [#allocation8], 4
      %s319 = int_to_ptr.vmem [resolvable:$true] %s318
      %321 = dma.vmem_to_hbm [thread:$0]  %s319, 64, %s3, [#allocation4]
    $region25: #{tpu_custom_call.1} parent=1 // pred_fallthru
      _
    // Predicated region
    $region26: #{tpu_custom_call.1} parent=1 // pred_check
      _
    $region27: #{tpu_custom_call.1} parent=1 // pred_check_branch
      %323 = sbr.rel (0) target = $region29
    $region28: #{tpu_custom_call.1} parent=1 // pred_region
      %s325 = ssub.s32 16, 16
      %326 = vsyncadd [#allocation5], %s325
      %329 = dma.smem_to_hbm [#allocation9], 16, %s4, [#allocation5]
    $region29: #{tpu_custom_call.1} parent=1 // pred_fallthru
      _
    // Predicated region
    $region30: #{tpu_custom_call.1} parent=1 // pred_check
      _
    $region31: #{tpu_custom_call.1} parent=1 // pred_check_branch
      %331 = sbr.rel (0) target = $region33
    $region32: #{tpu_custom_call.1} parent=1 // pred_region
      %332 = dma.done [#allocation4], 64
    $region33: #{tpu_custom_call.1} parent=1 // pred_fallthru
      _
    // Predicated region
    $region34: #{tpu_custom_call.1} parent=1 // pred_check
      _
    $region35: #{tpu_custom_call.1} parent=1 // pred_check_branch
      %334 = sbr.rel (0) target = $region37
    $region36: #{tpu_custom_call.1} parent=1 // pred_region
      %335 = dma.done [#allocation5], 16
    $region37: #{tpu_custom_call.1} parent=1 // pred_fallthru
      _
    %336 = sfence
    %337 = vsyncpa [#allocation3], 1
    %338 = vsyncpa [#allocation7], 1
    %339 = vsyncpa [#allocation4], 1
    %340 = vsyncpa [#allocation5], 1

</llo_original>
